<compile_context>
chip_gen: v7x
topology: tpu7x:2x2x1
jax: 0.10.0
libtpu: 0.0.40
codegen_flags: <defaults>
</compile_context>

<pallas_src>
import functools

import jax
import jax.numpy as jnp
import numpy as np
from jax.experimental import pallas as pl
from jax.experimental.pallas import tpu as pltpu

# (row, col) offsets of the 9 non-zero taps inside the 5x5 kernel.
HORSE_TAPS = ((0, 1), (0, 3), (1, 0), (1, 4), (2, 2), (3, 0), (3, 4), (4, 1), (4, 3))
KSIZE = 5
NUM_TAPS = len(HORSE_TAPS)


def _horse_conv_kernel(x_ref, w_ref, b_ref, o_ref, *, tap_offsets):
    # x_ref: (1, Cin, H*W)    w_ref: (Cout, 9*Cin)    b_ref: (Cout, 1)
    # o_ref: (1, Cout, L)  with L = (Ho-1)*W + Wo  (flat spatial, lane-dense)
    _, _, L = o_ref.shape

    # im2col: each tap is a pure lane-axis slice of the flattened image.
    # Stack the 9 shifted windows along the contraction axis (K = 9*Cin).
    cols = jnp.concatenate(
        [x_ref[0, :, off:off + L] for off in tap_offsets], axis=0)

    # Single fused MXU matmul; output lane axis = flat spatial (lane dense).
    acc = jnp.dot(w_ref[...], cols, preferred_element_type=jnp.float32)
    acc = acc + b_ref[...]                       # bias, broadcast along lanes
    o_ref[0] = acc.astype(o_ref.dtype)


def horse_conv(x_nchw, weight, bias):
    """x_nchw: (N, Cin, H, W); weight: (9, Cout, Cin); bias: (Cout,)."""
    N, Cin, H, W = x_nchw.shape
    n_taps, Cout, Cin_w = weight.shape
    assert n_taps == NUM_TAPS and Cin_w == Cin
    Ho, Wo = H - (KSIZE - 1), W - (KSIZE - 1)
    # Flat-spatial trick: with m = i*W + j, the tap (r, c) contribution is
    # x_flat[:, m + r*W + c]; only columns j < Wo of each row are valid conv
    # outputs, the rest are dropped in the wrapper.  L is the largest flat
    # index we need + 1; all 9 slices of length L stay in bounds.
    L = (Ho - 1) * W + Wo
    tap_offsets = tuple(r * W + c for (r, c) in HORSE_TAPS)

    # Layout plumbing (all contiguous reshapes / tiny tensors; no transposes
    # of the activation in HBM).
    x_flat = x_nchw.reshape(N, Cin, H * W)
    w_packed = jnp.transpose(weight, (1, 0, 2)).reshape(Cout, NUM_TAPS * Cin)
    b_col = bias.reshape(Cout, 1)

    itemsize = x_nchw.dtype.itemsize
    cost = pl.CostEstimate(
        flops=2 * N * Cout * NUM_TAPS * Cin * L,
        transcendentals=0,
        bytes_accessed=(N * Cin * H * W + Cout * NUM_TAPS * Cin + Cout
                        + N * Cout * L) * itemsize,
    )

    kernel = functools.partial(_horse_conv_kernel, tap_offsets=tap_offsets)

    out_flat = pl.pallas_call(
        kernel,
        out_shape=jax.ShapeDtypeStruct((N, Cout, L), x_nchw.dtype),
        grid_spec=pltpu.PrefetchScalarGridSpec(
            num_scalar_prefetch=0,
            grid=(N,),
            in_specs=[
                pl.BlockSpec((1, Cin, H * W), lambda n: (n, 0, 0)),
                pl.BlockSpec((Cout, NUM_TAPS * Cin), lambda n: (0, 0)),
                pl.BlockSpec((Cout, 1), lambda n: (0, 0)),
            ],
            out_specs=pl.BlockSpec((1, Cout, L), lambda n: (n, 0, 0)),
        ),
        compiler_params=pltpu.CompilerParams(
            dimension_semantics=("parallel",)),
        cost_estimate=cost,
    )(x_flat, w_packed, b_col)

    # Un-flatten: pad the flat axis to Ho*W (the W-Wo tail columns per row are
    # wrapped garbage), view as (Ho, W), and drop the invalid columns.
    out = jnp.pad(out_flat, ((0, 0), (0, 0), (0, Ho * W - L)))
    out = out.reshape(N, Cout, Ho, W)[:, :, :, :Wo]
    return out


def _reference(x_nchw, weight, bias):
    """Pure-JAX reference: scatter weights into a dense 5x5 kernel and conv."""
    _, Cout, Cin = weight.shape
    dense = jnp.zeros((Cout, Cin, KSIZE, KSIZE), dtype=weight.dtype)
    for k, (r, c) in enumerate(HORSE_TAPS):
        dense = dense.at[:, :, r, c].set(weight[k])
    out = jax.lax.conv_general_dilated(
        x_nchw, dense, window_strides=(1, 1), padding="VALID",
        dimension_numbers=("NCHW", "OIHW", "NCHW"))
    return out + bias[None, :, None, None]


if __name__ == "__main__":
    key = jax.random.PRNGKey(0)
    N, Cin, Cout, H, W = 2, 4, 8, 16, 16

    k_x, k_w = jax.random.split(key)
    x = jax.random.normal(k_x, (N, Cin, H, W), dtype=jnp.float32)

    # Deterministic kaiming-normal-like init for weight (9, Cout, Cin); bias = 0.
    fan_in = Cout * Cin  # matches torch's fan computation for a (9, Cout, Cin) tensor
    std = float(np.sqrt(2.0 / fan_in))
    weight = std * jax.random.normal(k_w, (NUM_TAPS, Cout, Cin), dtype=jnp.float32)
    bias = jnp.zeros((Cout,), dtype=jnp.float32)

    out = jax.block_until_ready(horse_conv(x, weight, bias))
    ref = jax.block_until_ready(_reference(x, weight, bias))

    assert out.shape == (N, Cout, H - 4, W - 4), out.shape
    np.testing.assert_allclose(np.asarray(out), np.asarray(ref),
                               rtol=1e-4, atol=1e-4)
    print("KERNEL_OK")
</pallas_src>

<mosaic_0001>
module attributes {stable_mosaic.version = 11 : i64} {
  func.func @_horse_conv_kernel(%arg0: i32, %arg1: memref<1x4x256xf32, #tpu.memory_space<vmem>>, %arg2: memref<8x36xf32, #tpu.memory_space<vmem>>, %arg3: memref<8x1xf32, #tpu.memory_space<vmem>>, %arg4: memref<1x8x188xf32, #tpu.memory_space<vmem>>) attributes {dimension_semantics = [#tpu.dimension_semantics<parallel>], iteration_bounds = array<i64: 2>, scalar_prefetch = 0 : i64, scratch_operands = 0 : i64, tpu.core_type = #tpu.core_type<tc>, window_params = [{transform_indices = @transform_0, window_bounds = array<i64: 1, 4, 256>}, {pipeline_mode = #tpu.pipeline_mode<synchronous>, transform_indices = @transform_1, window_bounds = array<i64: 8, 36>}, {pipeline_mode = #tpu.pipeline_mode<synchronous>, transform_indices = @transform_2, window_bounds = array<i64: 8, 1>}, {transform_indices = @transform_3, window_bounds = array<i64: 1, 8, 188>}]} {
    %c0 = arith.constant 0 : index
    %c0_0 = arith.constant 0 : index
    %c1 = arith.constant 1 : index
    %0 = vector.load %arg1[%c0, %c0_0, %c1] : memref<1x4x256xf32, #tpu.memory_space<vmem>>, vector<1x4x188xf32>
    %1 = vector.shape_cast %0 : vector<1x4x188xf32> to vector<4x188xf32>
    %c0_1 = arith.constant 0 : index
    %c0_2 = arith.constant 0 : index
    %c3 = arith.constant 3 : index
    %2 = vector.load %arg1[%c0_1, %c0_2, %c3] : memref<1x4x256xf32, #tpu.memory_space<vmem>>, vector<1x4x188xf32>
    %3 = vector.shape_cast %2 : vector<1x4x188xf32> to vector<4x188xf32>
    %c0_3 = arith.constant 0 : index
    %c0_4 = arith.constant 0 : index
    %c16 = arith.constant 16 : index
    %4 = vector.load %arg1[%c0_3, %c0_4, %c16] : memref<1x4x256xf32, #tpu.memory_space<vmem>>, vector<1x4x188xf32>
    %5 = vector.shape_cast %4 : vector<1x4x188xf32> to vector<4x188xf32>
    %c0_5 = arith.constant 0 : index
    %c0_6 = arith.constant 0 : index
    %c20 = arith.constant 20 : index
    %6 = vector.load %arg1[%c0_5, %c0_6, %c20] : memref<1x4x256xf32, #tpu.memory_space<vmem>>, vector<1x4x188xf32>
    %7 = vector.shape_cast %6 : vector<1x4x188xf32> to vector<4x188xf32>
    %c0_7 = arith.constant 0 : index
    %c0_8 = arith.constant 0 : index
    %c34 = arith.constant 34 : index
    %8 = vector.load %arg1[%c0_7, %c0_8, %c34] : memref<1x4x256xf32, #tpu.memory_space<vmem>>, vector<1x4x188xf32>
    %9 = vector.shape_cast %8 : vector<1x4x188xf32> to vector<4x188xf32>
    %c0_9 = arith.constant 0 : index
    %c0_10 = arith.constant 0 : index
    %c48 = arith.constant 48 : index
    %10 = vector.load %arg1[%c0_9, %c0_10, %c48] : memref<1x4x256xf32, #tpu.memory_space<vmem>>, vector<1x4x188xf32>
    %11 = vector.shape_cast %10 : vector<1x4x188xf32> to vector<4x188xf32>
    %c0_11 = arith.constant 0 : index
    %c0_12 = arith.constant 0 : index
    %c52 = arith.constant 52 : index
    %12 = vector.load %arg1[%c0_11, %c0_12, %c52] : memref<1x4x256xf32, #tpu.memory_space<vmem>>, vector<1x4x188xf32>
    %13 = vector.shape_cast %12 : vector<1x4x188xf32> to vector<4x188xf32>
    %c0_13 = arith.constant 0 : index
    %c0_14 = arith.constant 0 : index
    %c65 = arith.constant 65 : index
    %14 = vector.load %arg1[%c0_13, %c0_14, %c65] : memref<1x4x256xf32, #tpu.memory_space<vmem>>, vector<1x4x188xf32>
    %15 = vector.shape_cast %14 : vector<1x4x188xf32> to vector<4x188xf32>
    %c0_15 = arith.constant 0 : index
    %c0_16 = arith.constant 0 : index
    %c67 = arith.constant 67 : index
    %16 = vector.load %arg1[%c0_15, %c0_16, %c67] : memref<1x4x256xf32, #tpu.memory_space<vmem>>, vector<1x4x188xf32>
    %17 = vector.shape_cast %16 : vector<1x4x188xf32> to vector<4x188xf32>
    %18 = tpu.concatenate %1, %3, %5, %7, %9, %11, %13, %15, %17 in 0 : vector<4x188xf32>, vector<4x188xf32>, vector<4x188xf32>, vector<4x188xf32>, vector<4x188xf32>, vector<4x188xf32>, vector<4x188xf32>, vector<4x188xf32>, vector<4x188xf32> -> vector<36x188xf32>
    %c0_17 = arith.constant 0 : index
    %c0_18 = arith.constant 0 : index
    %19 = vector.load %arg2[%c0_17, %c0_18] : memref<8x36xf32, #tpu.memory_space<vmem>>, vector<8x36xf32>
    %cst = arith.constant dense<0.000000e+00> : vector<8x188xf32>
    %20 = tpu.matmul %19, %18, %cst {dimension_numbers = #tpu.dot_dimension_numbers<[1], [0], [0], [1], [0, 0, 1, 1], [], []>} : vector<8x36xf32>, vector<36x188xf32>, vector<8x188xf32> -> vector<8x188xf32>
    %c0_19 = arith.constant 0 : index
    %c0_20 = arith.constant 0 : index
    %21 = vector.load %arg3[%c0_19, %c0_20] : memref<8x1xf32, #tpu.memory_space<vmem>>, vector<8x1xf32>
    %22 = vector.broadcast %21 : vector<8x1xf32> to vector<8x188xf32>
    %23 = arith.addf %20, %22 : vector<8x188xf32>
    %c0_21 = arith.constant 0 : index
    %c0_22 = arith.constant 0 : index
    %c0_23 = arith.constant 0 : index
    %24 = vector.load %arg4[%c0_21, %c0_22, %c0_23] : memref<1x8x188xf32, #tpu.memory_space<vmem>>, vector<1x8x188xf32>
    %25 = vector.shape_cast %24 : vector<1x8x188xf32> to vector<8x188xf32>
    %26 = vector.shape_cast %23 : vector<8x188xf32> to vector<1x8x188xf32>
    tpu.vector_store %arg4[%c0_21, %c0_22, %c0_23], %26 {strides = array<i32>} : memref<1x8x188xf32, #tpu.memory_space<vmem>>, vector<1x8x188xf32>,
    return
  }
  func.func @transform_0(%arg0: i32) -> (i32, i32, i32) {
    %c0_i32 = arith.constant 0 : i32
    %c0_i32_0 = arith.constant 0 : i32
    %c0_i32_1 = arith.constant 0 : i32
    return %arg0, %c0_i32, %c0_i32_0 : i32, i32, i32
  }
  func.func @transform_1(%arg0: i32) -> (i32, i32) {
    %c0_i32 = arith.constant 0 : i32
    %c0_i32_0 = arith.constant 0 : i32
    %c0_i32_1 = arith.constant 0 : i32
    return %c0_i32, %c0_i32_0 : i32, i32
  }
  func.func @transform_2(%arg0: i32) -> (i32, i32) {
    %c0_i32 = arith.constant 0 : i32
    %c0_i32_0 = arith.constant 0 : i32
    %c0_i32_1 = arith.constant 0 : i32
    return %c0_i32, %c0_i32_0 : i32, i32
  }
  func.func @transform_3(%arg0: i32) -> (i32, i32, i32) {
    %c0_i32 = arith.constant 0 : i32
    %c0_i32_0 = arith.constant 0 : i32
    %c0_i32_1 = arith.constant 0 : i32
    return %arg0, %c0_i32, %c0_i32_0 : i32, i32, i32
  }
}

</mosaic_0001>

<llo_original>
// kernel: tpu_custom_call.1
$region0: #{tpu_custom_call.1}
  #allocation0 [shape = 'u32[]', space=smem, size = 0x4, offset = 0x4, fixed_abs, tag = 'smem constant byte address 0x4 - core index']
  #allocation1 [shape = 'u32[144,128]{1,0:T(1,128)}', space=vmem, size = 0x12000, scoped, tag = 'internal scratch']
  %s0 = inlined_call_operand.hbm [shape: f32[2,4,256], index: 0, kind: input, shape index: {}]
  %s1 = inlined_call_operand.vmem [shape: f32[8,36], index: 1, kind: input, shape index: {}]
  %s2 = inlined_call_operand.vmem [shape: f32[8,1], index: 2, kind: input, shape index: {}]
  %s3 = inlined_call_operand.hbm [shape: f32[2,8,188], index: 3, kind: output, shape index: {}]
  %s4 = sld [smem:[#allocation0]]
  $region49: #{tpu_custom_call.1} parent=0
    _
  %s6 = ssub.s32 1, %s4
  %s7 = scalar_select 0, %s6, %s4
  $region1: #{tpu_custom_call.1} parent=0
    #allocation2 [shape = 'u8[8192]{0}', space=vmem, size = 0x2000, scoped, tag = 'input window, operand 0']
    #allocation3 [shape = 's32[2]{0}', space=sflag, size = 0x8, scoped, tag = 'scoped memory for tpu_custom_call.1']
    #allocation4 [shape = 's32[2]{0}', space=sflag, size = 0x8, scoped, tag = 'scoped memory for tpu_custom_call.1']
    #allocation5 [shape = 'u8[16384]{0}', space=vmem, size = 0x4000, scoped, tag = 'output window, operand 0']
    %8 = vsyncpa [#allocation3], 0
    %s9 = scalar_lea.sflag [#allocation3], 1
    %10 = vsyncpa %s9, 0
    %11 = vsyncpa [#allocation4], 0
    %s12 = scalar_lea.sflag [#allocation4], 1
    %13 = vsyncpa %s12, 0
    loop: start=0, step=1, limit=4
    $region2: #{tpu_custom_call.1} parent=1 // loop_pre_header
      _
    $region3: #{tpu_custom_call.1} parent=1 // loop_header
      %s15 = sphi 0, %s19
      %p16 = scmp.ge.s32.totalorder %s15, 4
      %s25 = sphi 0, %s27
      %s28 = sphi 0, %s25
      %s29 = sphi 0, %s28
      %s45 = sphi 0, %s29
      %s49 = sphi 0, %s49
      %s51 = sphi 0, %s49
      %s52 = sphi 0, %s51
      %s66 = sphi 0, %s52
      %s70 = sphi 0, %s70
      %s72 = sphi 0, %s70
      %s73 = sphi 0, %s72
      %s87 = sphi 0, %s73
      %s93 = sphi 0, %s95
      %s96 = sphi 0, %s93
      %s97 = sphi 0, %s96
      %s113 = sphi 0, %s97
    $region4: #{tpu_custom_call.1} parent=1 // loop_header_branch
      %18 = sbr.rel (%p16) target = $region8
    $region5: #{tpu_custom_call.1} parent=1 // loop_body
      %s20 = ssub.s32 %s15, 1
      %s21 = ssub.s32 %s15, 2
      %s22 = sadd.s32 %s15, 1
      %s23 = ssub.s32 %s15, %s22
      %p24 = scmp.eq.s32.totalorder %s23, 0
      %s26 = sadd.s32 %s25, 1
      %s27 = scalar_select %p24, %s25, %s26
      %p30 = pneg %p24
      %p31 = scmp.eq.s32.totalorder %s15, 1
      %p32 = por %p30, %p31
      %p33 = scmp.ne.s32.totalorder %s25, %s28
      %p34 = scmp.eq.s32.totalorder %s15, 0
      %p35 = por %p33, %p34
      %p36 = scmp.ne.s32.totalorder %s25, %s28
      %p37 = scmp.eq.s32.totalorder %s20, 1
      %p38 = por %p36, %p37
      %p39 = scmp.ne.s32.totalorder %s28, %s29
      %p40 = scmp.eq.s32.totalorder %s20, 0
      %p41 = por %p39, %p40
      %p42 = scmp.ne.s32.totalorder %s28, %s29
      %p43 = scmp.eq.s32.totalorder %s21, 1
      %p44 = por %p42, %p43
      %p46 = scmp.ne.s32.totalorder %s29, %s45
      %p47 = scmp.eq.s32.totalorder %s21, 0
      %p48 = por %p46, %p47
      %s50 = sadd.s32 %s49, 1
      %p53 = scmp.eq.s32.totalorder %s15, 1
      %p54 = scmp.ne.s32.totalorder %s49, %s51
      %p55 = scmp.eq.s32.totalorder %s15, 0
      %p56 = por %p54, %p55
      %p57 = scmp.ne.s32.totalorder %s49, %s51
      %p58 = scmp.eq.s32.totalorder %s20, 1
      %p59 = por %p57, %p58
      %p60 = scmp.ne.s32.totalorder %s51, %s52
      %p61 = scmp.eq.s32.totalorder %s20, 0
      %p62 = por %p60, %p61
      %p63 = scmp.ne.s32.totalorder %s51, %s52
      %p64 = scmp.eq.s32.totalorder %s21, 1
      %p65 = por %p63, %p64
      %p67 = scmp.ne.s32.totalorder %s52, %s66
      %p68 = scmp.eq.s32.totalorder %s21, 0
      %p69 = por %p67, %p68
      %s71 = sadd.s32 %s70, 1
      %p74 = scmp.eq.s32.totalorder %s15, 1
      %p75 = scmp.ne.s32.totalorder %s70, %s72
      %p76 = scmp.eq.s32.totalorder %s15, 0
      %p77 = por %p75, %p76
      %p78 = scmp.ne.s32.totalorder %s70, %s72
      %p79 = scmp.eq.s32.totalorder %s20, 1
      %p80 = por %p78, %p79
      %p81 = scmp.ne.s32.totalorder %s72, %s73
      %p82 = scmp.eq.s32.totalorder %s20, 0
      %p83 = por %p81, %p82
      %p84 = scmp.ne.s32.totalorder %s72, %s73
      %p85 = scmp.eq.s32.totalorder %s21, 1
      %p86 = por %p84, %p85
      %p88 = scmp.ne.s32.totalorder %s73, %s87
      %p89 = scmp.eq.s32.totalorder %s21, 0
      %p90 = por %p88, %p89
      %s91 = ssub.s32 %s15, %s22
      %p92 = scmp.eq.s32.totalorder %s91, 0
      %s94 = sadd.s32 %s93, 1
      %s95 = scalar_select %p92, %s93, %s94
      %p98 = pneg %p92
      %p99 = scmp.eq.s32.totalorder %s15, 1
      %p100 = por %p98, %p99
      %p101 = scmp.ne.s32.totalorder %s93, %s96
      %p102 = scmp.eq.s32.totalorder %s15, 0
      %p103 = por %p101, %p102
      %p104 = scmp.ne.s32.totalorder %s93, %s96
      %p105 = scmp.eq.s32.totalorder %s20, 1
      %p106 = por %p104, %p105
      %p107 = scmp.ne.s32.totalorder %s96, %s97
      %p108 = scmp.eq.s32.totalorder %s20, 0
      %p109 = por %p107, %p108
      %p110 = scmp.ne.s32.totalorder %s96, %s97
      %p111 = scmp.eq.s32.totalorder %s21, 1
      %p112 = por %p110, %p111
      %p114 = scmp.ne.s32.totalorder %s97, %s113
      %p115 = scmp.eq.s32.totalorder %s21, 0
      %p116 = por %p114, %p115
      %p117 = scmp.le.s32.totalorder 1, %s15
      %p118 = scmp.lt.s32.totalorder %s15, 3
      %p119 = pnand %p117, %p118
      %p120 = pneg %p119
      // Predicated region
      $region9: #{tpu_custom_call.1} parent=5 // pred_check
        _
      $region10: #{tpu_custom_call.1} parent=5 // pred_check_branch
        %122 = sbr.rel (%p119) target = $region12
      $region11: #{tpu_custom_call.1} parent=5 // pred_region
        %s123 = ssub.s32 %s15, 1
        // Predicated region
        $region13: #{tpu_custom_call.1} parent=11 // pred_check
          %p124 = pneg %p62
        $region14: #{tpu_custom_call.1} parent=11 // pred_check_branch
          %126 = sbr.rel (%p124) target = $region16
        $region15: #{tpu_custom_call.1} parent=11 // pred_region
          _
        $region16: #{tpu_custom_call.1} parent=11 // pred_fallthru
          _
        // Predicated region
        $region17: #{tpu_custom_call.1} parent=11 // pred_check
          %p127 = pneg %p83
        $region18: #{tpu_custom_call.1} parent=11 // pred_check_branch
          %129 = sbr.rel (%p127) target = $region20
        $region19: #{tpu_custom_call.1} parent=11 // pred_region
          _
        $region20: #{tpu_custom_call.1} parent=11 // pred_fallthru
          _
      $region12: #{tpu_custom_call.1} parent=5 // pred_fallthru
        _
      %p130 = scmp.lt.s32.totalorder %s15, 2
      // Predicated region
      $region21: #{tpu_custom_call.1} parent=5 // pred_check
        %p131 = pneg %p130
      $region22: #{tpu_custom_call.1} parent=5 // pred_check_branch
        %133 = sbr.rel (%p131) target = $region24
      $region23: #{tpu_custom_call.1} parent=5 // pred_region
        // Predicated region
        $region25: #{tpu_custom_call.1} parent=23 // pred_check
          %p134 = pneg %p35
        $region26: #{tpu_custom_call.1} parent=23 // pred_check_branch
          %136 = sbr.rel (%p134) target = $region28
        $region27: #{tpu_custom_call.1} parent=23 // pred_region
          %s137 = sand.u32 %s25, 1
          %s138 = scalar_lea.sflag [#allocation3], %s137
          %s139 = sand.u32 %s25, 1
          %s140 = smul.addr %s139, 8
          %s141 = scalar_lea.vmem [#allocation2], %s140
          %s143 = ssub.s32 128, 128
          %144 = vsyncadd %s138, %s143
          %s145 = smul.addr %s15, 2
          %s146 = smul.addr %s145, 64
          %s147 = scalar_lea.hbm %s0, %s146
          %s149 = sshll.u32 %s141, 4
          %s150 = int_to_ptr.vmem [resolvable:$true] %s149
          %152 = dma.hbm_to_vmem [thread:$0]  %s147, 128, %s150, %s138
        $region28: #{tpu_custom_call.1} parent=23 // pred_fallthru
          _
      $region24: #{tpu_custom_call.1} parent=5 // pred_fallthru
        _
      %p153 = scmp.le.s32.totalorder 1, %s15
      %p154 = scmp.lt.s32.totalorder %s15, 3
      %p155 = pnand %p153, %p154
      %p156 = pneg %p155
      // Predicated region
      $region29: #{tpu_custom_call.1} parent=5 // pred_check
        _
      $region30: #{tpu_custom_call.1} parent=5 // pred_check_branch
        %158 = sbr.rel (%p155) target = $region32
      $region31: #{tpu_custom_call.1} parent=5 // pred_region
        %s159 = ssub.s32 %s15, 1
        %s160 = sand.u32 %s28, 1
        %s161 = scalar_lea.sflag [#allocation3], %s160
        %s162 = sand.u32 %s28, 1
        %s163 = smul.addr %s162, 8
        %s164 = scalar_lea.vmem [#allocation2], %s163
        // Predicated region
        $region33: #{tpu_custom_call.1} parent=31 // pred_check
          %p165 = pneg %p41
        $region34: #{tpu_custom_call.1} parent=31 // pred_check_branch
          %167 = sbr.rel (%p165) target = $region36
        $region35: #{tpu_custom_call.1} parent=31 // pred_region
          %168 = dma.done %s161, 128
        $region36: #{tpu_custom_call.1} parent=31 // pred_fallthru
          _
        %s169 = sand.u32 %s28, 1
        %s170 = scalar_lea.sflag [#allocation3], %s169
        %s171 = sand.u32 %s28, 1
        %s172 = smul.addr %s171, 8
        %s173 = scalar_lea.vmem [#allocation2], %s172
        %p174 = pneg %p41
        %p175 = pneg %p38
        %p176 = pneg %p62
        %p177 = pneg %p59
        %p178 = pneg %p83
        %p179 = pneg %p80
        %p180 = pneg %p109
        %p181 = pneg %p106
        %s182 = sand.u32 %s96, 1
        %s183 = scalar_lea.sflag [#allocation4], %s182
        %s184 = sand.u32 %s96, 1
        %s185 = smul.addr %s184, 16
        %s186 = scalar_lea.vmem [#allocation5], %s185
        %v187 = vld [vmem:[%s164] sm:$0xff]
        %v189 = vcombine.high %v187, %v187
        %v191 = vcombine.low %v187, %v187
        %192 = vrot.lane.b32.xlu0 %v191, 126
        %v193 = vpop.permute.xlu0 %192
        %194 = vrot.lane.b32.xlu0 %v187, 126
        %v195 = vpop.permute.xlu0 %194
        %vm196 = vcmask 1031168
        %v197 = vsel %vm196, %v193, %v195
        %200 = vrot.lane.b32.xlu0 %v187, 113
        %v201 = vpop.permute.xlu0 %200
        %202 = vrot.lane.b32.xlu0 %v189, 113
        %v203 = vpop.permute.xlu0 %202
        %vm204 = vcmask 924672
        %v205 = vsel %vm204, %v201, %v203
        %208 = vrot.lane.b32.xlu0 %v191, 109
        %v209 = vpop.permute.xlu0 %208
        %210 = vrot.lane.b32.xlu0 %v187, 109
        %v211 = vpop.permute.xlu0 %210
        %vm212 = vcmask 891904
        %v213 = vsel %vm212, %v209, %v211
        %216 = vrot.lane.b32.xlu0 %v187, 95
        %v217 = vpop.permute.xlu0 %216
        %218 = vrot.lane.b32.xlu0 %v189, 95
        %v219 = vpop.permute.xlu0 %218
        %vm220 = vcmask 777216
        %v221 = vsel %vm220, %v217, %v219
        %224 = vrot.lane.b32.xlu0 %v191, 81
        %v225 = vpop.permute.xlu0 %224
        %226 = vrot.lane.b32.xlu0 %v187, 81
        %v227 = vpop.permute.xlu0 %226
        %vm228 = vcmask 662528
        %v229 = vsel %vm228, %v225, %v227
        %232 = vrot.lane.b32.xlu0 %v187, 77
        %v233 = vpop.permute.xlu0 %232
        %234 = vrot.lane.b32.xlu0 %v189, 77
        %v235 = vpop.permute.xlu0 %234
        %vm236 = vcmask 629760
        %v237 = vsel %vm236, %v233, %v235
        %240 = vrot.lane.b32.xlu0 %v191, 64
        %v241 = vpop.permute.xlu0 %240
        %242 = vrot.lane.b32.xlu0 %v187, 64
        %v243 = vpop.permute.xlu0 %242
        %vm244 = vcmask 523264
        %v245 = vsel %vm244, %v241, %v243
        %248 = vrot.lane.b32.xlu0 %v187, 62
        %v249 = vpop.permute.xlu0 %248
        %250 = vrot.lane.b32.xlu0 %v189, 62
        %v251 = vpop.permute.xlu0 %250
        %vm252 = vcmask 506880
        %v253 = vsel %vm252, %v249, %v251
        %vm254 = vcmask 1043456
        %v255 = vsel %vm254, %v187, %v197
        %v256 = vsel %vm254, %v189, %v195
        %v257 = vsel %vm254, %v205, %v213
        %v258 = vsel %vm254, %v203, %v211
        %v259 = vsel %vm254, %v221, %v229
        %v260 = vsel %vm254, %v219, %v227
        %v261 = vsel %vm254, %v237, %v245
        %v262 = vsel %vm254, %v235, %v243
        %v263 = vld [vmem:[%s1] sm:$0xff]
        %v264 = vld [vmem:[%s2] sm:$0xff]
        %266 = vset.pattern.permute.xlu0 0
        %267 = vperm.xlu0 %266, %v264
        %v268 = vpop.permute.xlu0 %267
        %278 = vrot.lane.b32.xlu0 %v255, 127
        %v279 = vpop.permute.xlu0 %278
        %280 = vrot.lane.b32.xlu0 %v256, 127
        %v281 = vpop.permute.xlu0 %280
        %282 = vrot.lane.b32.xlu0 %v257, 127
        %v283 = vpop.permute.xlu0 %282
        %284 = vrot.lane.b32.xlu0 %v258, 127
        %v285 = vpop.permute.xlu0 %284
        %286 = vrot.lane.b32.xlu0 %v259, 127
        %v287 = vpop.permute.xlu0 %286
        %288 = vrot.lane.b32.xlu0 %v260, 127
        %v289 = vpop.permute.xlu0 %288
        %290 = vrot.lane.b32.xlu0 %v261, 127
        %v291 = vpop.permute.xlu0 %290
        %292 = vrot.lane.b32.xlu0 %v262, 127
        %v293 = vpop.permute.xlu0 %292
        %294 = vrot.lane.b32.xlu0 %v253, 127
        %v295 = vpop.permute.xlu0 %294
        %296 = vrot.lane.b32.xlu0 %v251, 127
        %v297 = vpop.permute.xlu0 %296
        %vm298 = vcmask 1039360
        %v299 = vsel %vm298, %v279, %v281
        %v300 = vsel %vm298, %v283, %v285
        %v301 = vsel %vm298, %v287, %v289
        %v302 = vsel %vm298, %v291, %v293
        %v303 = vsel %vm298, %v295, %v297
        %vm312 = vcmask 293888
        %v314 = vsel %vm312, %v263, 0
        %v316 = vsel %vm254, %v303, 0
        %v318 = vsel %vm254, %v297, 0
        %320 = vmatprep.subr.mxu0 %v281
        %321 = vmatpush1.msra.mxu0 %v299
        %322 = vmatprep.subr.mxu0 %v285
        %323 = vmatpush1.msra.mxu0 %v300
        %324 = vmatprep.subr.mxu0 %v289
        %325 = vmatpush1.msra.mxu0 %v301
        %326 = vmatprep.subr.mxu0 %v293
        %327 = vmatpush1.msra.mxu0 %v302
        %328 = vmatprep.subr.mxu0 %v318
        %329 = vmatpush1.msra.mxu0 %v316
        %330 = vmatprep.subr.mxu0 0.0
        %331 = vmatpush1.msra.mxu0 0.0
        %332 = vmatprep.subr.mxu0 0.0
        %333 = vmatpush1.msra.mxu0 0.0
        %334 = vmatprep.subr.mxu0 0.0
        %335 = vmatpush1.msra.mxu0 0.0
        %336 = vmatprep.subr.mxu0 0.0
        %337 = vmatpush1.msra.mxu0 0.0
        %338 = vmatprep.subr.mxu0 0.0
        %339 = vmatpush1.msra.mxu0 0.0
        %340 = vmatprep.subr.mxu0 0.0
        %341 = vmatpush1.msra.mxu0 0.0
        %342 = vmatprep.subr.mxu0 0.0
        %343 = vmatpush1.msra.mxu0 0.0
        %344 = vmatprep.subr.mxu0 0.0
        %345 = vmatpush1.msra.mxu0 0.0
        %346 = vmatprep.subr.mxu0 0.0
        %347 = vmatpush1.msra.mxu0 0.0
        %348 = vmatprep.subr.mxu0 0.0
        %349 = vmatpush1.msra.mxu0 0.0
        %350 = vmatprep.subr.mxu0 0.0
        %351 = vmatpush1.msra.mxu0 0.0
        %352 = vmatprep.subr.mxu0 0.0
        %353 = vmatpush1.msra.mxu0 0.0
        %354 = vmatprep.subr.mxu0 0.0
        %355 = vmatpush1.msra.mxu0 0.0
        %356 = vmatprep.subr.mxu0 0.0
        %357 = vmatpush1.msra.mxu0 0.0
        %358 = vmatprep.subr.mxu0 0.0
        %359 = vmatpush1.msra.mxu0 0.0
        %360 = vmatprep.subr.mxu0 0.0
        %361 = vmatpush1.msra.mxu0 0.0
        %362 = vmatprep.subr.mxu0 0.0
        %363 = vmatpush1.msra.mxu0 0.0
        %364 = vmatprep.subr.mxu0 0.0
        %365 = vmatpush1.msra.mxu0 0.0
        %366 = vmatprep.subr.mxu0 0.0
        %367 = vmatpush1.msra.mxu0 0.0
        %368 = vmatprep.subr.mxu0 0.0
        %369 = vmatpush1.msra.mxu0 0.0
        %370 = vmatprep.subr.mxu0 0.0
        %371 = vmatpush1.msra.mxu0 0.0
        %372 = vmatprep.subr.mxu0 0.0
        %373 = vmatpush1.msra.mxu0 0.0
        %374 = vmatprep.subr.mxu0 0.0
        %375 = vmatpush1.msra.mxu0 0.0
        %376 = vmatprep.subr.mxu0 0.0
        %377 = vmatpush1.msra.mxu0 0.0
        %378 = vmatprep.subr.mxu0 0.0
        %379 = vmatpush1.msra.mxu0 0.0
        %380 = vmatprep.subr.mxu0 0.0
        %381 = vmatpush1.msra.mxu0 0.0
        %382 = vmatprep.subr.mxu0 0.0
        %383 = vmatpush1.msra.mxu0 0.0
        %384 = vmatprep.mubr.f32.mxu0 0.0
        %385 = vmatmul.mubr.f32.gmra.mrb[0].mxu0 %v314
        %v386 = vpop.f32.mrb[0].mxu0
        %v387 = vadd.f32 %v268, %v386
        %v388 = vpop.f32.mrb[0].mxu0
        %v389 = vadd.f32 %v268, %v388
        %390 = vdwg.mxu0
        %391 = vst [vmem:[%s186] sm:$0xff] %v387
        %vm392 = vcmask 490496
        %393 = vst.msk [vmem:[%s186 + $0x8] sm:$0xff] %vm392, %v389
        %s394 = sand.u32 %s96, 1
        %s395 = scalar_lea.sflag [#allocation4], %s394
        %s396 = sand.u32 %s96, 1
        %s397 = smul.addr %s396, 16
        %s398 = scalar_lea.vmem [#allocation5], %s397
        // Predicated region
        $region37: #{tpu_custom_call.1} parent=31 // pred_check
          %p399 = pneg %p106
        $region38: #{tpu_custom_call.1} parent=31 // pred_check_branch
          %401 = sbr.rel (%p399) target = $region40
        $region39: #{tpu_custom_call.1} parent=31 // pred_region
          %s403 = ssub.s32 256, 256
          %404 = vsyncadd %s395, %s403
          %s405 = smul.addr %s20, 2
          %s406 = smul.addr %s405, 128
          %s407 = scalar_lea.hbm %s3, %s406
          %s409 = sshll.u32 %s398, 4
          %s410 = int_to_ptr.vmem [resolvable:$true] %s409
          %412 = dma.vmem_to_hbm [thread:$0]  %s410, 256, %s407, %s395
        $region40: #{tpu_custom_call.1} parent=31 // pred_fallthru
          _
      $region32: #{tpu_custom_call.1} parent=5 // pred_fallthru
        _
      %p413 = scmp.le.s32.totalorder 2, %s15
      // Predicated region
      $region41: #{tpu_custom_call.1} parent=5 // pred_check
        %p414 = pneg %p413
      $region42: #{tpu_custom_call.1} parent=5 // pred_check_branch
        %416 = sbr.rel (%p414) target = $region44
      $region43: #{tpu_custom_call.1} parent=5 // pred_region
        %s417 = ssub.s32 %s15, 2
        // Predicated region
        $region45: #{tpu_custom_call.1} parent=43 // pred_check
          %p418 = pneg %p112
        $region46: #{tpu_custom_call.1} parent=43 // pred_check_branch
          %420 = sbr.rel (%p418) target = $region48
        $region47: #{tpu_custom_call.1} parent=43 // pred_region
          %s421 = sand.u32 %s97, 1
          %s422 = scalar_lea.sflag [#allocation4], %s421
          %s423 = sand.u32 %s97, 1
          %s424 = smul.addr %s423, 16
          %s425 = scalar_lea.vmem [#allocation5], %s424
          %426 = dma.done %s422, 256
        $region48: #{tpu_custom_call.1} parent=43 // pred_fallthru
          _
      $region44: #{tpu_custom_call.1} parent=5 // pred_fallthru
        _
    $region6: #{tpu_custom_call.1} parent=1 // loop_footer
      %s19 = sadd.s32 1, %s15
    $region7: #{tpu_custom_call.1} parent=1 // loop_footer_branch
      %14 = sbr.rel target = $region3
    $region8: #{tpu_custom_call.1} parent=1 // loop_exit
      _
    %427 = vsyncpa [#allocation3], 1
    %s428 = scalar_lea.sflag [#allocation3], 1
    %429 = vsyncpa %s428, 1
    %430 = vsyncpa [#allocation4], 1
    %s431 = scalar_lea.sflag [#allocation4], 1
    %432 = vsyncpa %s431, 1

</llo_original>
